<compile_context>
chip_gen: v7x
topology: tpu7x:2x2x1
jax: 0.10.0
libtpu: 0.0.40
codegen_flags: <defaults>
</compile_context>

<pallas_src>
import functools

import jax
import jax.numpy as jnp
from jax import lax
from jax.experimental import pallas as pl
from jax.experimental.pallas import tpu as pltpu


def _accum_tile(p_ref, l_ref, sx, sy, sxy, sx2, sy2, *, valid):
    """Accumulate per-row Σx, Σy, Σxy, Σx², Σy² of the current (tb, tt) block.

    `valid` is a STATIC count of in-bounds lanes of this block (== tt for full
    blocks, < tt only for the ragged last T block).  Out-of-bounds lanes are
    zeroed with a static mask so they contribute nothing to any sum.
    """
    tb, tt = p_ref.shape
    lanes = sx.shape[-1]

    if lanes == 1:
        # Small-T fallback (single full-extent block not a multiple of 128):
        # one grid step, so a direct cross-lane reduce is fine here.
        x = p_ref[...].astype(jnp.float32)
        y = l_ref[...].astype(jnp.float32)
        sx[...] += jnp.sum(x, axis=-1, keepdims=True)
        sy[...] += jnp.sum(y, axis=-1, keepdims=True)
        sxy[...] += jnp.sum(x * y, axis=-1, keepdims=True)
        sx2[...] += jnp.sum(x * x, axis=-1, keepdims=True)
        sy2[...] += jnp.sum(y * y, axis=-1, keepdims=True)
        return

    # Wide-accumulator path: lane-wise adds only (VPU); no XLU in the hot loop.
    ax, ay, axy, ax2, ay2 = sx[...], sy[...], sxy[...], sx2[...], sy2[...]
    n_chunks = (valid + lanes - 1) // lanes  # fully out-of-bounds chunks are skipped
    for c in range(n_chunks):
        lo = c * lanes
        xc = p_ref[:, lo:lo + lanes].astype(jnp.float32)
        yc = l_ref[:, lo:lo + lanes].astype(jnp.float32)
        if lo + lanes > valid:  # ragged chunk: static lane mask
            m = (lo + lax.broadcasted_iota(jnp.int32, (tb, lanes), 1)) < valid
            xc = jnp.where(m, xc, 0.0)
            yc = jnp.where(m, yc, 0.0)
        ax = ax + xc
        ay = ay + yc
        axy = axy + xc * yc
        ax2 = ax2 + xc * xc
        ay2 = ay2 + yc * yc
    sx[...] = ax
    sy[...] = ay
    sxy[...] = axy
    sx2[...] = ax2
    sy2[...] = ay2


def _neg_pearson_kernel(p_ref, l_ref, o_ref, sx, sy, sxy, sx2, sy2, *, n, tt, num_t):
    """Processes one (tb, tt) tile; grid axis 1 (T) is the reduction axis."""
    t = pl.program_id(1)
    last = num_t - 1

    # Reset the per-row accumulators at the start of each batch block's T sweep.
    @pl.when(t == 0)
    def _():
        for s in (sx, sy, sxy, sx2, sy2):
            s[...] = jnp.zeros_like(s)

    rem = n - last * tt  # static: valid lanes in the final T block (0 < rem <= tt)
    if rem == tt:
        # T divides evenly into blocks: single, unmasked accumulation path.
        _accum_tile(p_ref, l_ref, sx, sy, sxy, sx2, sy2, valid=tt)
    else:
        # Only the last T block is ragged; mask it there (and only there).
        @pl.when(t != last)
        def _():
            _accum_tile(p_ref, l_ref, sx, sy, sxy, sx2, sy2, valid=tt)

        @pl.when(t == last)
        def _():
            _accum_tile(p_ref, l_ref, sx, sy, sxy, sx2, sy2, valid=rem)

    # Finalize: single cross-lane reduce per batch block + per-row Pearson via
    # rsqrt (EUP) + mul instead of sqrt + divide.
    @pl.when(t == last)
    def _():
        nf = jnp.float32(n)
        s_x = jnp.sum(sx[...], axis=-1, keepdims=True)
        s_y = jnp.sum(sy[...], axis=-1, keepdims=True)
        s_xy = jnp.sum(sxy[...], axis=-1, keepdims=True)
        s_x2 = jnp.sum(sx2[...], axis=-1, keepdims=True)
        s_y2 = jnp.sum(sy2[...], axis=-1, keepdims=True)
        num = nf * s_xy - s_x * s_y
        var_x = nf * s_x2 - s_x * s_x
        var_y = nf * s_y2 - s_y * s_y
        o_ref[...] = 1.0 - num * lax.rsqrt(var_x * var_y)


def _ceil_to(x, m):
    return ((x + m - 1) // m) * m


def neg_pearson_loss(preds, labels, *, tb=None, tt=None):
    """preds, labels: (B, T) arrays (f32/bf16/fp16). Returns scalar mean_i(1 - pearson_i)."""
    assert preds.shape == labels.shape and preds.ndim == 2
    B, T = preds.shape

    # Batch block: full extent for tiny B; otherwise a multiple of 8 chosen so the
    # "parallel" batch axis has >= 2 blocks (dual-TC sharding on v7x), capped at 64
    # rows so the five wide (tb, 128) accumulators stay within the vreg budget.
    if tb is None:
        tb = B if B <= 8 else min(64, _ceil_to((B + 1) // 2, 8))
    # T block: full extent for small T, else 8192 lanes.  Per-step input footprint
    # at (64, 8192) f32 is 2 x 2 MiB, double-buffered 16 MiB -> fits the 32 MiB
    # default scoped VMEM everywhere; the ragged T tail is masked in-kernel, so no
    # jnp.pad HBM copy is ever made.
    if tt is None:
        tt = T if T <= 8192 else 8192

    assert 0 < tt <= T and (tt == T or tt % 128 == 0), \
        "tt must be a multiple of 128 (or the full T)"
    assert 0 < tb <= B and (tb == B or tb % 8 == 0), \
        "tb must be a multiple of 8 (or the full B)"

    num_b = pl.cdiv(B, tb)
    num_t = pl.cdiv(T, tt)
    lanes = 128 if tt % 128 == 0 else 1

    per_row = pl.pallas_call(
        functools.partial(_neg_pearson_kernel, n=T, tt=tt, num_t=num_t),
        out_shape=jax.ShapeDtypeStruct((B, 1), jnp.float32),
        grid_spec=pltpu.PrefetchScalarGridSpec(
            num_scalar_prefetch=0,
            grid=(num_b, num_t),
            in_specs=[
                pl.BlockSpec((tb, tt), lambda b, t: (b, t)),
                pl.BlockSpec((tb, tt), lambda b, t: (b, t)),
            ],
            out_specs=pl.BlockSpec((tb, 1), lambda b, t: (b, 0)),
            scratch_shapes=[pltpu.VMEM((tb, lanes), jnp.float32)] * 5,
        ),
        compiler_params=pltpu.CompilerParams(
            dimension_semantics=("parallel", "arbitrary"),
        ),
    )(preds, labels)

    return jnp.sum(per_row) / B


def _reference(preds, labels):
    # Pure-JAX reference mirroring the PyTorch loop (vectorized over rows).
    B, N = preds.shape
    x = preds.astype(jnp.float32)
    y = labels.astype(jnp.float32)
    sum_x = jnp.sum(x, axis=1)
    sum_y = jnp.sum(y, axis=1)
    sum_xy = jnp.sum(x * y, axis=1)
    sum_x2 = jnp.sum(x * x, axis=1)
    sum_y2 = jnp.sum(y * y, axis=1)
    pearson = (N * sum_xy - sum_x * sum_y) / jnp.sqrt(
        (N * sum_x2 - sum_x ** 2) * (N * sum_y2 - sum_y ** 2))
    return jnp.mean(1.0 - pearson)


if __name__ == "__main__":
    key = jax.random.PRNGKey(0)
    k1, k2, k3, k4 = jax.random.split(key, 4)

    # Case 1: small shapes matching the module's (batch, signal_len) inputs.
    B, T = 4, 256
    preds = jax.random.normal(k1, (B, T), dtype=jnp.float32)
    labels = 0.7 * preds + 0.3 * jax.random.normal(k2, (B, T), dtype=jnp.float32)
    loss = jax.block_until_ready(neg_pearson_loss(preds, labels))
    ref = _reference(preds, labels)
    assert jnp.allclose(loss, ref, rtol=1e-4, atol=1e-5), (loss, ref)

    # Case 2: ragged T tail (200 = 128 + 72) and partial batch block (10 = 8 + 2),
    # handled entirely in-kernel — no wrapper-side padding copies.
    B2, T2 = 10, 200
    p2 = jax.random.normal(k3, (B2, T2), dtype=jnp.float32)
    l2 = 0.5 * p2 + 0.5 * jax.random.normal(k4, (B2, T2), dtype=jnp.float32)
    loss2 = jax.block_until_ready(neg_pearson_loss(p2, l2, tb=8, tt=128))
    ref2 = _reference(p2, l2)
    assert jnp.allclose(loss2, ref2, rtol=1e-4, atol=1e-5), (loss2, ref2)

    print("KERNEL_OK")
</pallas_src>

<mosaic_0001>
module attributes {stable_mosaic.version = 11 : i64} {
  func.func @_neg_pearson_kernel(%arg0: i32, %arg1: i32, %arg2: memref<4x256xf32, #tpu.memory_space<vmem>>, %arg3: memref<4x256xf32, #tpu.memory_space<vmem>>, %arg4: memref<4x1xf32, #tpu.memory_space<vmem>>, %arg5: memref<4x128xf32, #tpu.memory_space<vmem>>, %arg6: memref<4x128xf32, #tpu.memory_space<vmem>>, %arg7: memref<4x128xf32, #tpu.memory_space<vmem>>, %arg8: memref<4x128xf32, #tpu.memory_space<vmem>>, %arg9: memref<4x128xf32, #tpu.memory_space<vmem>>) attributes {dimension_semantics = [#tpu.dimension_semantics<parallel>, #tpu.dimension_semantics<arbitrary>], iteration_bounds = array<i64: 1, 1>, scalar_prefetch = 0 : i64, scratch_operands = 5 : i64, tpu.core_type = #tpu.core_type<tc>, window_params = [{transform_indices = @transform_0, window_bounds = array<i64: 4, 256>}, {transform_indices = @transform_1, window_bounds = array<i64: 4, 256>}, {transform_indices = @transform_2, window_bounds = array<i64: 4, 1>}]} {
    %c0_i32 = arith.constant 0 : i32
    %0 = arith.cmpi eq, %arg1, %c0_i32 : i32
    %1 = arith.extui %0 : i1 to i32
    %c0_i32_0 = arith.constant 0 : i32
    %2 = arith.cmpi ne, %1, %c0_i32_0 : i32
    scf.if %2 {
      %cst = arith.constant 0.000000e+00 : f32
      %36 = vector.broadcast %cst : f32 to vector<4x128xf32>
      %c0_29 = arith.constant 0 : index
      %c0_30 = arith.constant 0 : index
      %37 = vector.load %arg5[%c0_29, %c0_30] : memref<4x128xf32, #tpu.memory_space<vmem>>, vector<4x128xf32>
      tpu.vector_store %arg5[%c0_29, %c0_30], %36 {strides = array<i32>} : memref<4x128xf32, #tpu.memory_space<vmem>>, vector<4x128xf32>,
      %cst_31 = arith.constant 0.000000e+00 : f32
      %38 = vector.broadcast %cst_31 : f32 to vector<4x128xf32>
      %c0_32 = arith.constant 0 : index
      %c0_33 = arith.constant 0 : index
      %39 = vector.load %arg6[%c0_32, %c0_33] : memref<4x128xf32, #tpu.memory_space<vmem>>, vector<4x128xf32>
      tpu.vector_store %arg6[%c0_32, %c0_33], %38 {strides = array<i32>} : memref<4x128xf32, #tpu.memory_space<vmem>>, vector<4x128xf32>,
      %cst_34 = arith.constant 0.000000e+00 : f32
      %40 = vector.broadcast %cst_34 : f32 to vector<4x128xf32>
      %c0_35 = arith.constant 0 : index
      %c0_36 = arith.constant 0 : index
      %41 = vector.load %arg7[%c0_35, %c0_36] : memref<4x128xf32, #tpu.memory_space<vmem>>, vector<4x128xf32>
      tpu.vector_store %arg7[%c0_35, %c0_36], %40 {strides = array<i32>} : memref<4x128xf32, #tpu.memory_space<vmem>>, vector<4x128xf32>,
      %cst_37 = arith.constant 0.000000e+00 : f32
      %42 = vector.broadcast %cst_37 : f32 to vector<4x128xf32>
      %c0_38 = arith.constant 0 : index
      %c0_39 = arith.constant 0 : index
      %43 = vector.load %arg8[%c0_38, %c0_39] : memref<4x128xf32, #tpu.memory_space<vmem>>, vector<4x128xf32>
      tpu.vector_store %arg8[%c0_38, %c0_39], %42 {strides = array<i32>} : memref<4x128xf32, #tpu.memory_space<vmem>>, vector<4x128xf32>,
      %cst_40 = arith.constant 0.000000e+00 : f32
      %44 = vector.broadcast %cst_40 : f32 to vector<4x128xf32>
      %c0_41 = arith.constant 0 : index
      %c0_42 = arith.constant 0 : index
      %45 = vector.load %arg9[%c0_41, %c0_42] : memref<4x128xf32, #tpu.memory_space<vmem>>, vector<4x128xf32>
      tpu.vector_store %arg9[%c0_41, %c0_42], %44 {strides = array<i32>} : memref<4x128xf32, #tpu.memory_space<vmem>>, vector<4x128xf32>,
    } else {
    }
    %c0 = arith.constant 0 : index
    %c0_1 = arith.constant 0 : index
    %3 = vector.load %arg5[%c0, %c0_1] : memref<4x128xf32, #tpu.memory_space<vmem>>, vector<4x128xf32>
    %c0_2 = arith.constant 0 : index
    %c0_3 = arith.constant 0 : index
    %4 = vector.load %arg6[%c0_2, %c0_3] : memref<4x128xf32, #tpu.memory_space<vmem>>, vector<4x128xf32>
    %c0_4 = arith.constant 0 : index
    %c0_5 = arith.constant 0 : index
    %5 = vector.load %arg7[%c0_4, %c0_5] : memref<4x128xf32, #tpu.memory_space<vmem>>, vector<4x128xf32>
    %c0_6 = arith.constant 0 : index
    %c0_7 = arith.constant 0 : index
    %6 = vector.load %arg8[%c0_6, %c0_7] : memref<4x128xf32, #tpu.memory_space<vmem>>, vector<4x128xf32>
    %c0_8 = arith.constant 0 : index
    %c0_9 = arith.constant 0 : index
    %7 = vector.load %arg9[%c0_8, %c0_9] : memref<4x128xf32, #tpu.memory_space<vmem>>, vector<4x128xf32>
    %c0_10 = arith.constant 0 : index
    %c0_11 = arith.constant 0 : index
    %8 = vector.load %arg2[%c0_10, %c0_11] : memref<4x256xf32, #tpu.memory_space<vmem>>, vector<4x128xf32>
    %c0_12 = arith.constant 0 : index
    %c0_13 = arith.constant 0 : index
    %9 = vector.load %arg3[%c0_12, %c0_13] : memref<4x256xf32, #tpu.memory_space<vmem>>, vector<4x128xf32>
    %10 = arith.addf %3, %8 : vector<4x128xf32>
    %11 = arith.addf %4, %9 : vector<4x128xf32>
    %12 = arith.mulf %8, %9 : vector<4x128xf32>
    %13 = arith.addf %5, %12 : vector<4x128xf32>
    %14 = arith.mulf %8, %8 : vector<4x128xf32>
    %15 = arith.addf %6, %14 : vector<4x128xf32>
    %16 = arith.mulf %9, %9 : vector<4x128xf32>
    %17 = arith.addf %7, %16 : vector<4x128xf32>
    %c0_14 = arith.constant 0 : index
    %c128 = arith.constant 128 : index
    %18 = vector.load %arg2[%c0_14, %c128] : memref<4x256xf32, #tpu.memory_space<vmem>>, vector<4x128xf32>
    %c0_15 = arith.constant 0 : index
    %c128_16 = arith.constant 128 : index
    %19 = vector.load %arg3[%c0_15, %c128_16] : memref<4x256xf32, #tpu.memory_space<vmem>>, vector<4x128xf32>
    %20 = arith.addf %10, %18 : vector<4x128xf32>
    %21 = arith.addf %11, %19 : vector<4x128xf32>
    %22 = arith.mulf %18, %19 : vector<4x128xf32>
    %23 = arith.addf %13, %22 : vector<4x128xf32>
    %24 = arith.mulf %18, %18 : vector<4x128xf32>
    %25 = arith.addf %15, %24 : vector<4x128xf32>
    %26 = arith.mulf %19, %19 : vector<4x128xf32>
    %27 = arith.addf %17, %26 : vector<4x128xf32>
    %c0_17 = arith.constant 0 : index
    %c0_18 = arith.constant 0 : index
    %28 = vector.load %arg5[%c0_17, %c0_18] : memref<4x128xf32, #tpu.memory_space<vmem>>, vector<4x128xf32>
    tpu.vector_store %arg5[%c0_17, %c0_18], %20 {strides = array<i32>} : memref<4x128xf32, #tpu.memory_space<vmem>>, vector<4x128xf32>,
    %c0_19 = arith.constant 0 : index
    %c0_20 = arith.constant 0 : index
    %29 = vector.load %arg6[%c0_19, %c0_20] : memref<4x128xf32, #tpu.memory_space<vmem>>, vector<4x128xf32>
    tpu.vector_store %arg6[%c0_19, %c0_20], %21 {strides = array<i32>} : memref<4x128xf32, #tpu.memory_space<vmem>>, vector<4x128xf32>,
    %c0_21 = arith.constant 0 : index
    %c0_22 = arith.constant 0 : index
    %30 = vector.load %arg7[%c0_21, %c0_22] : memref<4x128xf32, #tpu.memory_space<vmem>>, vector<4x128xf32>
    tpu.vector_store %arg7[%c0_21, %c0_22], %23 {strides = array<i32>} : memref<4x128xf32, #tpu.memory_space<vmem>>, vector<4x128xf32>,
    %c0_23 = arith.constant 0 : index
    %c0_24 = arith.constant 0 : index
    %31 = vector.load %arg8[%c0_23, %c0_24] : memref<4x128xf32, #tpu.memory_space<vmem>>, vector<4x128xf32>
    tpu.vector_store %arg8[%c0_23, %c0_24], %25 {strides = array<i32>} : memref<4x128xf32, #tpu.memory_space<vmem>>, vector<4x128xf32>,
    %c0_25 = arith.constant 0 : index
    %c0_26 = arith.constant 0 : index
    %32 = vector.load %arg9[%c0_25, %c0_26] : memref<4x128xf32, #tpu.memory_space<vmem>>, vector<4x128xf32>
    tpu.vector_store %arg9[%c0_25, %c0_26], %27 {strides = array<i32>} : memref<4x128xf32, #tpu.memory_space<vmem>>, vector<4x128xf32>,
    %c0_i32_27 = arith.constant 0 : i32
    %33 = arith.cmpi eq, %arg1, %c0_i32_27 : i32
    %34 = arith.extui %33 : i1 to i32
    %c0_i32_28 = arith.constant 0 : i32
    %35 = arith.cmpi ne, %34, %c0_i32_28 : i32
    scf.if %35 {
      %c0_29 = arith.constant 0 : index
      %c0_30 = arith.constant 0 : index
      %36 = vector.load %arg5[%c0_29, %c0_30] : memref<4x128xf32, #tpu.memory_space<vmem>>, vector<4x128xf32>
      %cst = arith.constant dense<0.000000e+00> : vector<4xf32>
      %37 = vector.multi_reduction <add>, %36, %cst [1] : vector<4x128xf32> to vector<4xf32>
      %38 = vector.shape_cast %37 : vector<4xf32> to vector<4x1xf32>
      %c0_31 = arith.constant 0 : index
      %c0_32 = arith.constant 0 : index
      %39 = vector.load %arg6[%c0_31, %c0_32] : memref<4x128xf32, #tpu.memory_space<vmem>>, vector<4x128xf32>
      %cst_33 = arith.constant dense<0.000000e+00> : vector<4xf32>
      %40 = vector.multi_reduction <add>, %39, %cst_33 [1] : vector<4x128xf32> to vector<4xf32>
      %41 = vector.shape_cast %40 : vector<4xf32> to vector<4x1xf32>
      %c0_34 = arith.constant 0 : index
      %c0_35 = arith.constant 0 : index
      %42 = vector.load %arg7[%c0_34, %c0_35] : memref<4x128xf32, #tpu.memory_space<vmem>>, vector<4x128xf32>
      %cst_36 = arith.constant dense<0.000000e+00> : vector<4xf32>
      %43 = vector.multi_reduction <add>, %42, %cst_36 [1] : vector<4x128xf32> to vector<4xf32>
      %44 = vector.shape_cast %43 : vector<4xf32> to vector<4x1xf32>
      %c0_37 = arith.constant 0 : index
      %c0_38 = arith.constant 0 : index
      %45 = vector.load %arg8[%c0_37, %c0_38] : memref<4x128xf32, #tpu.memory_space<vmem>>, vector<4x128xf32>
      %cst_39 = arith.constant dense<0.000000e+00> : vector<4xf32>
      %46 = vector.multi_reduction <add>, %45, %cst_39 [1] : vector<4x128xf32> to vector<4xf32>
      %47 = vector.shape_cast %46 : vector<4xf32> to vector<4x1xf32>
      %c0_40 = arith.constant 0 : index
      %c0_41 = arith.constant 0 : index
      %48 = vector.load %arg9[%c0_40, %c0_41] : memref<4x128xf32, #tpu.memory_space<vmem>>, vector<4x128xf32>
      %cst_42 = arith.constant dense<0.000000e+00> : vector<4xf32>
      %49 = vector.multi_reduction <add>, %48, %cst_42 [1] : vector<4x128xf32> to vector<4xf32>
      %50 = vector.shape_cast %49 : vector<4xf32> to vector<4x1xf32>
      %cst_43 = arith.constant 2.560000e+02 : f32
      %51 = vector.broadcast %cst_43 : f32 to vector<4x1xf32>
      %52 = arith.mulf %51, %44 : vector<4x1xf32>
      %53 = arith.mulf %38, %41 : vector<4x1xf32>
      %54 = arith.subf %52, %53 : vector<4x1xf32>
      %cst_44 = arith.constant 2.560000e+02 : f32
      %55 = vector.broadcast %cst_44 : f32 to vector<4x1xf32>
      %56 = arith.mulf %55, %47 : vector<4x1xf32>
      %57 = arith.mulf %38, %38 : vector<4x1xf32>
      %58 = arith.subf %56, %57 : vector<4x1xf32>
      %cst_45 = arith.constant 2.560000e+02 : f32
      %59 = vector.broadcast %cst_45 : f32 to vector<4x1xf32>
      %60 = arith.mulf %59, %50 : vector<4x1xf32>
      %61 = arith.mulf %41, %41 : vector<4x1xf32>
      %62 = arith.subf %60, %61 : vector<4x1xf32>
      %63 = arith.mulf %58, %62 : vector<4x1xf32>
      %64 = math.rsqrt %63 : vector<4x1xf32>
      %65 = arith.mulf %54, %64 : vector<4x1xf32>
      %cst_46 = arith.constant 1.000000e+00 : f32
      %66 = vector.broadcast %cst_46 : f32 to vector<4x1xf32>
      %67 = arith.subf %66, %65 : vector<4x1xf32>
      %c0_47 = arith.constant 0 : index
      %c0_48 = arith.constant 0 : index
      %68 = vector.load %arg4[%c0_47, %c0_48] : memref<4x1xf32, #tpu.memory_space<vmem>>, vector<4x1xf32>
      tpu.vector_store %arg4[%c0_47, %c0_48], %67 {strides = array<i32>} : memref<4x1xf32, #tpu.memory_space<vmem>>, vector<4x1xf32>,
    } else {
    }
    return
  }
  func.func @transform_0(%arg0: i32, %arg1: i32) -> (i32, i32) {
    %c0_i32 = arith.constant 0 : i32
    return %arg0, %arg1 : i32, i32
  }
  func.func @transform_1(%arg0: i32, %arg1: i32) -> (i32, i32) {
    %c0_i32 = arith.constant 0 : i32
    return %arg0, %arg1 : i32, i32
  }
  func.func @transform_2(%arg0: i32, %arg1: i32) -> (i32, i32) {
    %c0_i32 = arith.constant 0 : i32
    %c0_i32_0 = arith.constant 0 : i32
    return %arg0, %c0_i32 : i32, i32
  }
}

</mosaic_0001>

<llo_original>
// kernel: tpu_custom_call.1
$region0: #{tpu_custom_call.1}
  #allocation0 [shape = 'u32[]', space=smem, size = 0x4, offset = 0x4, fixed_abs, tag = 'smem constant byte address 0x4 - core index']
  #allocation1 [shape = 'u32[144,128]{1,0:T(1,128)}', space=vmem, size = 0x12000, scoped, tag = 'internal scratch']
  #allocation2 [shape = 'f32[4,128]{1,0:T(4,128)}', space=vmem, size = 0x800, scoped, tag = 'scratch operand']
  #allocation3 [shape = 'f32[4,128]{1,0:T(4,128)}', space=vmem, size = 0x800, scoped, tag = 'scratch operand']
  #allocation4 [shape = 'f32[4,128]{1,0:T(4,128)}', space=vmem, size = 0x800, scoped, tag = 'scratch operand']
  #allocation5 [shape = 'f32[4,128]{1,0:T(4,128)}', space=vmem, size = 0x800, scoped, tag = 'scratch operand']
  #allocation6 [shape = 'f32[4,128]{1,0:T(4,128)}', space=vmem, size = 0x800, scoped, tag = 'scratch operand']
  %s0 = inlined_call_operand.hbm [shape: f32[4,256], index: 0, kind: input, shape index: {}]
  %s1 = inlined_call_operand.hbm [shape: f32[4,256], index: 1, kind: input, shape index: {}]
  %s2 = inlined_call_operand.vmem [shape: f32[4,1], index: 2, kind: output, shape index: {}]
  %s3 = sld [smem:[#allocation0]]
  $region34: #{tpu_custom_call.1} parent=0
    _
  %s5 = ssub.s32 1, %s3
  %s6 = scalar_select 0, %s5, %s3
  $region1: #{tpu_custom_call.1} parent=0
    #allocation7 [shape = 'u8[4096]{0}', space=vmem, size = 0x1000, scoped, tag = 'input window, operand 0, single buffered']
    #allocation8 [shape = 's32[1]{0}', space=sflag, size = 0x4, scoped, tag = 'scoped memory for tpu_custom_call.1']
    #allocation9 [shape = 'u8[4096]{0}', space=vmem, size = 0x1000, scoped, tag = 'input window, operand 1, single buffered']
    #allocation10 [shape = 's32[1]{0}', space=sflag, size = 0x4, scoped, tag = 'scoped memory for tpu_custom_call.1']
    %7 = vsyncpa [#allocation8], 0
    %8 = vsyncpa [#allocation10], 0
    // Predicated region
    $region2: #{tpu_custom_call.1} parent=1 // pred_check
      _
    $region3: #{tpu_custom_call.1} parent=1 // pred_check_branch
      %10 = sbr.rel (0) target = $region5
    $region4: #{tpu_custom_call.1} parent=1 // pred_region
      %s12 = ssub.s32 128, 128
      %13 = vsyncadd [#allocation8], %s12
      %s15 = sshll.u32 [#allocation7], 4
      %s16 = int_to_ptr.vmem [resolvable:$true] %s15
      %18 = dma.hbm_to_vmem [thread:$0]  %s0, 128, %s16, [#allocation8]
    $region5: #{tpu_custom_call.1} parent=1 // pred_fallthru
      _
    // Predicated region
    $region6: #{tpu_custom_call.1} parent=1 // pred_check
      _
    $region7: #{tpu_custom_call.1} parent=1 // pred_check_branch
      %20 = sbr.rel (0) target = $region9
    $region8: #{tpu_custom_call.1} parent=1 // pred_region
      %s22 = ssub.s32 128, 128
      %23 = vsyncadd [#allocation10], %s22
      %s25 = sshll.u32 [#allocation9], 4
      %s26 = int_to_ptr.vmem [resolvable:$true] %s25
      %28 = dma.hbm_to_vmem [thread:$0]  %s1, 128, %s26, [#allocation10]
    $region9: #{tpu_custom_call.1} parent=1 // pred_fallthru
      _
    // Predicated region
    $region10: #{tpu_custom_call.1} parent=1 // pred_check
      _
    $region11: #{tpu_custom_call.1} parent=1 // pred_check_branch
      %30 = sbr.rel (0) target = $region13
    $region12: #{tpu_custom_call.1} parent=1 // pred_region
      %31 = dma.done [#allocation8], 128
    $region13: #{tpu_custom_call.1} parent=1 // pred_fallthru
      _
    // Predicated region
    $region14: #{tpu_custom_call.1} parent=1 // pred_check
      _
    $region15: #{tpu_custom_call.1} parent=1 // pred_check_branch
      %33 = sbr.rel (0) target = $region17
    $region16: #{tpu_custom_call.1} parent=1 // pred_region
      %34 = dma.done [#allocation10], 128
    $region17: #{tpu_custom_call.1} parent=1 // pred_fallthru
      _
    %p35 = scmp.eq.s32.totalorder 0, 0
    // Predicated region
    $region18: #{tpu_custom_call.1} parent=1 // pred_check
      %p36 = pneg %p35
    $region19: #{tpu_custom_call.1} parent=1 // pred_check_branch
      %38 = sbr.rel (%p36) target = $region21
    $region20: #{tpu_custom_call.1} parent=1 // pred_region
      %39 = vst [vmem:[#allocation2] sm:$0xf] 0.0
      %40 = vst [vmem:[#allocation3] sm:$0xf] 0.0
      %41 = vst [vmem:[#allocation4] sm:$0xf] 0.0
      %42 = vst [vmem:[#allocation5] sm:$0xf] 0.0
      %43 = vst [vmem:[#allocation6] sm:$0xf] 0.0
    $region21: #{tpu_custom_call.1} parent=1 // pred_fallthru
      _
    %v44 = vld [vmem:[#allocation2] sm:$0xf]
    %v45 = vld [vmem:[#allocation3] sm:$0xf]
    %v46 = vld [vmem:[#allocation4] sm:$0xf]
    %v47 = vld [vmem:[#allocation5] sm:$0xf]
    %v48 = vld [vmem:[#allocation6] sm:$0xf]
    %v49 = vld [vmem:[#allocation7] sm:$0xf]
    %v50 = vld [vmem:[#allocation9] sm:$0xf]
    %v51 = vadd.f32 %v44, %v49
    %v52 = vadd.f32 %v45, %v50
    %v53 = vmul.f32 %v49, %v50
    %v54 = vadd.f32 %v46, %v53
    %v55 = vmul.f32 %v49, %v49
    %v56 = vadd.f32 %v47, %v55
    %v57 = vmul.f32 %v50, %v50
    %v58 = vadd.f32 %v48, %v57
    %v59 = vld [vmem:[#allocation7 + $0x4] sm:$0xf]
    %v60 = vld [vmem:[#allocation9 + $0x4] sm:$0xf]
    %v61 = vadd.f32 %v51, %v59
    %v62 = vadd.f32 %v52, %v60
    %v63 = vmul.f32 %v59, %v60
    %v64 = vadd.f32 %v54, %v63
    %v65 = vmul.f32 %v59, %v59
    %v66 = vadd.f32 %v56, %v65
    %v67 = vmul.f32 %v60, %v60
    %v68 = vadd.f32 %v58, %v67
    %69 = vst [vmem:[#allocation2] sm:$0xf] %v61
    %70 = vst [vmem:[#allocation3] sm:$0xf] %v62
    %71 = vst [vmem:[#allocation4] sm:$0xf] %v64
    %72 = vst [vmem:[#allocation5] sm:$0xf] %v66
    %73 = vst [vmem:[#allocation6] sm:$0xf] %v68
    // Predicated region
    $region22: #{tpu_custom_call.1} parent=1 // pred_check
      %p74 = pneg %p35
    $region23: #{tpu_custom_call.1} parent=1 // pred_check_branch
      %76 = sbr.rel (%p74) target = $region25
    $region24: #{tpu_custom_call.1} parent=1 // pred_region
      %v77 = vld [vmem:[#allocation2] sm:$0xf]
      %vm78 = vcmask 1043456
      %v79 = vsel %vm78, %v77, 0.0
      %80 = vadd.xlane.f32.xlu0 %v79
      %v81 = vpop.xlane.xlu0 %80
      %v82 = vld [vmem:[#allocation3] sm:$0xf]
      %v83 = vsel %vm78, %v82, 0.0
      %84 = vadd.xlane.f32.xlu0 %v83
      %v85 = vpop.xlane.xlu0 %84
      %v86 = vld [vmem:[#allocation4] sm:$0xf]
      %v87 = vsel %vm78, %v86, 0.0
      %88 = vadd.xlane.f32.xlu0 %v87
      %v89 = vpop.xlane.xlu0 %88
      %v90 = vld [vmem:[#allocation5] sm:$0xf]
      %v91 = vsel %vm78, %v90, 0.0
      %92 = vadd.xlane.f32.xlu0 %v91
      %v93 = vpop.xlane.xlu0 %92
      %v94 = vld [vmem:[#allocation6] sm:$0xf]
      %v95 = vsel %vm78, %v94, 0.0
      %96 = vadd.xlane.f32.xlu0 %v95
      %v97 = vpop.xlane.xlu0 %96
      %v98 = vmul.f32 %v89, 256.0
      %v99 = vmul.f32 %v81, %v85
      %v100 = vsub.f32 %v98, %v99
      %v101 = vmul.f32 %v93, 256.0
      %v102 = vmul.f32 %v81, %v81
      %v103 = vsub.f32 %v101, %v102
      %v104 = vmul.f32 %v97, 256.0
      %v105 = vmul.f32 %v85, %v85
      %v106 = vsub.f32 %v104, %v105
      %v107 = vmul.f32 %v103, %v106
      %v108 = vrsqrt.pop %v107
      %v109 = vmul.f32 %v100, %v108
      %v110 = vsub.f32 1.0, %v109
      %vm111 = vcmask 3072
      %112 = vst.msk [vmem:[%s2] sm:$0xf] %vm111, %v110
    $region25: #{tpu_custom_call.1} parent=1 // pred_fallthru
      _
    // Predicated region
    $region26: #{tpu_custom_call.1} parent=1 // pred_check
      _
    $region27: #{tpu_custom_call.1} parent=1 // pred_check_branch
      %114 = sbr.rel (0) target = $region29
    $region28: #{tpu_custom_call.1} parent=1 // pred_region
      _
    $region29: #{tpu_custom_call.1} parent=1 // pred_fallthru
      _
    // Predicated region
    $region30: #{tpu_custom_call.1} parent=1 // pred_check
      _
    $region31: #{tpu_custom_call.1} parent=1 // pred_check_branch
      %116 = sbr.rel (0) target = $region33
    $region32: #{tpu_custom_call.1} parent=1 // pred_region
      _
    $region33: #{tpu_custom_call.1} parent=1 // pred_fallthru
      _
    %117 = vsyncpa [#allocation8], 1
    %118 = vsyncpa [#allocation10], 1

</llo_original>
